<compile_context>
chip_gen: v7x
topology: tpu7x:2x2x1
jax: 0.10.0
libtpu: 0.0.40
codegen_flags: <defaults>
</compile_context>

<pallas_src>
import jax
import jax.numpy as jnp
from jax.experimental import pallas as pl
from jax.experimental.pallas import tpu as pltpu


# ----------------------------------------------------------------------------
# Fused tiled matmul kernel: dot + bias (+ shortcut) (+ relu) (+ preact out)
# ----------------------------------------------------------------------------
def _make_kernel(*, relu, emit_preact, shortcut_mode):
    """shortcut_mode in ('none', 'matmul', 'add'); all flags are Python-static."""

    def kernel(*refs):
        if shortcut_mode == "none":
            lhs_ref, rhs_ref, bias_ref = refs[0:3]
            rest = refs[3:]
            sc_lhs_ref = sc_w_ref = sc_ref = None
        elif shortcut_mode == "matmul":
            lhs_ref, rhs_ref, bias_ref, sc_lhs_ref, sc_w_ref = refs[0:5]
            rest = refs[5:]
            sc_ref = None
        else:  # "add"
            lhs_ref, rhs_ref, bias_ref, sc_ref = refs[0:4]
            rest = refs[4:]
            sc_lhs_ref = sc_w_ref = None

        if emit_preact:
            out_ref, preact_ref, acc_ref = rest
        else:
            out_ref, acc_ref = rest
            preact_ref = None

        k = pl.program_id(2)

        @pl.when(k == 0)
        def _init():
            acc_ref[...] = jnp.zeros_like(acc_ref)

        acc_ref[...] += jnp.dot(lhs_ref[...], rhs_ref[...],
                                preferred_element_type=jnp.float32)

        @pl.when(k == pl.num_programs(2) - 1)
        def _finalize():
            pre = acc_ref[...] + bias_ref[...]
            if shortcut_mode == "matmul":
                pre = pre + jnp.dot(sc_lhs_ref[...], sc_w_ref[...],
                                    preferred_element_type=jnp.float32)
            elif shortcut_mode == "add":
                pre = pre + sc_ref[...]
            if emit_preact:
                preact_ref[...] = pre.astype(preact_ref.dtype)
            out = jnp.maximum(pre, 0.0) if relu else pre
            out_ref[...] = out.astype(out_ref.dtype)

    return kernel


def _round_up(x, m):
    return (x + m - 1) // m * m


def _choose_tiles(m, k, n):
    # Lane-dense output tiles: 128 minimum, 256 when Cout is big enough
    # (matches v6e/v7x 2x256 MXU; 128 is fine for v5e's 4x128 MXU).
    n_pad128 = _round_up(n, 128)
    tn = 256 if n_pad128 >= 256 else 128
    tk = min(_round_up(k, 128), 1152)   # multiple of 128, capped for VMEM
    tm = min(_round_up(m, 128), 512)
    return tm, tk, tn


def _pad2(a, rows, cols):
    pr, pc = rows - a.shape[0], cols - a.shape[1]
    if pr or pc:
        a = jnp.pad(a, ((0, pr), (0, pc)))
    return a


def fused_conv_matmul(lhs, rhs, bias, *, relu, emit_preact=False,
                      shortcut_mode="none", sc_lhs=None, sc_w=None,
                      sc_add=None):
    """out = act(lhs @ rhs + bias [+ shortcut]); lhs (M,K), rhs (K,N), bias (N,)."""
    M, K = lhs.shape
    N = rhs.shape[1]
    tm, tk, tn = _choose_tiles(M, K, N)
    Mp, Kp, Np = _round_up(M, tm), _round_up(K, tk), _round_up(N, tn)

    lhs_p = _pad2(lhs.astype(jnp.bfloat16), Mp, Kp)
    rhs_p = _pad2(rhs.astype(jnp.bfloat16), Kp, Np)
    bias_p = _pad2(bias.reshape(1, -1).astype(jnp.float32), 1, Np)

    grid = (Mp // tm, Np // tn, Kp // tk)

    in_specs = [
        pl.BlockSpec((tm, tk), lambda i, j, k: (i, k)),
        pl.BlockSpec((tk, tn), lambda i, j, k: (k, j)),
        pl.BlockSpec((1, tn), lambda i, j, k: (0, j)),
    ]
    args = [lhs_p, rhs_p, bias_p]

    flops = 2.0 * Mp * Kp * Np
    bytes_acc = (lhs_p.size * 2 * grid[1] + rhs_p.size * 2 * grid[0]
                 + bias_p.size * 4 + Mp * Np * 4)

    if shortcut_mode == "matmul":
        Ksc = sc_lhs.shape[1]
        Kscp = _round_up(Ksc, 128)
        sc_lhs_p = _pad2(sc_lhs.astype(jnp.bfloat16), Mp, Kscp)
        sc_w_p = _pad2(sc_w.astype(jnp.bfloat16), Kscp, Np)
        in_specs += [pl.BlockSpec((tm, Kscp), lambda i, j, k: (i, 0)),
                     pl.BlockSpec((Kscp, tn), lambda i, j, k: (0, j))]
        args += [sc_lhs_p, sc_w_p]
        flops += 2.0 * Mp * Kscp * Np
        bytes_acc += sc_lhs_p.size * 2 * grid[1] + sc_w_p.size * 2 * grid[0]
    elif shortcut_mode == "add":
        sc_p = _pad2(sc_add.astype(jnp.float32), Mp, Np)
        in_specs += [pl.BlockSpec((tm, tn), lambda i, j, k: (i, j))]
        args += [sc_p]
        bytes_acc += sc_p.size * 4

    out_shape = [jax.ShapeDtypeStruct((Mp, Np), jnp.float32)]
    out_specs = [pl.BlockSpec((tm, tn), lambda i, j, k: (i, j))]
    if emit_preact:
        out_shape.append(jax.ShapeDtypeStruct((Mp, Np), jnp.float32))
        out_specs.append(pl.BlockSpec((tm, tn), lambda i, j, k: (i, j)))
        bytes_acc += Mp * Np * 4

    kernel = _make_kernel(relu=relu, emit_preact=emit_preact,
                          shortcut_mode=shortcut_mode)

    result = pl.pallas_call(
        kernel,
        grid=grid,
        in_specs=in_specs,
        out_specs=tuple(out_specs) if emit_preact else out_specs[0],
        out_shape=tuple(out_shape) if emit_preact else out_shape[0],
        scratch_shapes=[pltpu.VMEM((tm, tn), jnp.float32)],
        compiler_params=pltpu.CompilerParams(
            dimension_semantics=("parallel", "parallel", "arbitrary"),
            vmem_limit_bytes=32 * 1024 * 1024),
        cost_estimate=pl.CostEstimate(flops=int(flops), transcendentals=0,
                                      bytes_accessed=int(bytes_acc)),
    )(*args)

    if emit_preact:
        out_p, preact_p = result
        return out_p[:M, :N], preact_p[:M, :N]
    return result[:M, :N]


# ----------------------------------------------------------------------------
# Glue: im2col patch extraction, BN folding, weight repacking
# ----------------------------------------------------------------------------
def _im2col(x_nhwc, ksize, stride, pad):
    """x_nhwc: (N, H, W, C) -> (N*Hout*Wout, ksize*ksize*C)."""
    n, h, w, c = x_nhwc.shape
    hout = (h + 2 * pad - ksize) // stride + 1
    wout = (w + 2 * pad - ksize) // stride + 1
    xp = jnp.pad(x_nhwc, ((0, 0), (pad, pad), (pad, pad), (0, 0)))
    taps = []
    for i in range(ksize):
        for j in range(ksize):
            taps.append(xp[:, i:i + stride * hout:stride,
                           j:j + stride * wout:stride, :])
    patches = jnp.concatenate(taps, axis=-1)  # (N, Hout, Wout, k*k*C)
    return patches.reshape(n * hout * wout, ksize * ksize * c), hout, wout


def _pack_weight(w_oihw):
    """PyTorch (Cout, Cin, kh, kw) -> (kh*kw*Cin, Cout), matching im2col order."""
    cout, cin, kh, kw = w_oihw.shape
    return jnp.transpose(w_oihw, (2, 3, 1, 0)).reshape(kh * kw * cin, cout)


def _fold_bn(gamma, beta, mean, var, eps=1e-5):
    scale = gamma / jnp.sqrt(var + eps)
    bias = beta - mean * scale
    return scale, bias


# ----------------------------------------------------------------------------
# BasicBlock forward (Pallas)
# ----------------------------------------------------------------------------
def basic_block_forward(x_nchw, params, *, stride, is_last):
    x = jnp.transpose(x_nchw, (0, 2, 3, 1)).astype(jnp.float32)  # NHWC
    n, h, w, cin = x.shape
    planes = params["w1"].shape[0]
    x_bf = x.astype(jnp.bfloat16)

    # conv1 (3x3, stride) + bn1 + relu  (BN scale folded into weight columns)
    s1, b1 = _fold_bn(params["g1"], params["b1"], params["m1"], params["v1"])
    w1p = _pack_weight(params["w1"]) * s1[None, :]
    p1, hout, wout = _im2col(x_bf, 3, stride, 1)
    out1 = fused_conv_matmul(p1, w1p, b1, relu=True)
    out1_nhwc = out1.reshape(n, hout, wout, planes)

    # conv2 (3x3, stride 1) + bn2 + shortcut + relu, fused in a single kernel
    s2, b2 = _fold_bn(params["g2"], params["b2"], params["m2"], params["v2"])
    w2p = _pack_weight(params["w2"]) * s2[None, :]
    p2, _, _ = _im2col(out1_nhwc.astype(jnp.bfloat16), 3, 1, 1)

    if stride != 1 or cin != planes:
        # projection shortcut: 1x1 conv + BN fused into conv2's finalize step
        ssc, bsc = _fold_bn(params["gsc"], params["bsc"],
                            params["msc"], params["vsc"])
        wscp = _pack_weight(params["wsc"]) * ssc[None, :]
        xs = x_bf[:, ::stride, ::stride, :].reshape(n * hout * wout, cin)
        res = fused_conv_matmul(p2, w2p, b2 + bsc, relu=True,
                                emit_preact=is_last,
                                shortcut_mode="matmul", sc_lhs=xs, sc_w=wscp)
    else:
        # identity shortcut: fused residual add (f32, exact)
        sc = x.reshape(n * hout * wout, planes)
        res = fused_conv_matmul(p2, w2p, b2, relu=True,
                                emit_preact=is_last,
                                shortcut_mode="add", sc_add=sc)

    if is_last:
        out_flat, pre_flat = res
    else:
        out_flat = res

    out = jnp.transpose(out_flat.reshape(n, hout, wout, planes), (0, 3, 1, 2))
    if is_last:
        preact = jnp.transpose(pre_flat.reshape(n, hout, wout, planes),
                               (0, 3, 1, 2))
        return out, preact
    return out


# ----------------------------------------------------------------------------
# Pure-JAX reference (f32) for correctness check
# ----------------------------------------------------------------------------
def _ref_forward(x, params, *, stride, eps=1e-5):
    def conv(x, w, s, pad):
        return jax.lax.conv_general_dilated(
            x, w, (s, s), ((pad, pad), (pad, pad)),
            dimension_numbers=("NCHW", "OIHW", "NCHW"))

    def bn(x, g, b, m, v):
        sc = g / jnp.sqrt(v + eps)
        return x * sc[None, :, None, None] + (b - m * sc)[None, :, None, None]

    out = jax.nn.relu(bn(conv(x, params["w1"], stride, 1),
                         params["g1"], params["b1"], params["m1"], params["v1"]))
    out = bn(conv(out, params["w2"], 1, 1),
             params["g2"], params["b2"], params["m2"], params["v2"])
    cin, planes = params["w1"].shape[1], params["w1"].shape[0]
    if stride != 1 or cin != planes:
        sc = bn(conv(x, params["wsc"], stride, 0),
                params["gsc"], params["bsc"], params["msc"], params["vsc"])
    else:
        sc = x
    pre = out + sc
    return jax.nn.relu(pre), pre


# ----------------------------------------------------------------------------
def _make_params(key, in_planes, planes):
    ks = jax.random.split(key, 12)
    f32 = jnp.float32
    return {
        "w1": 0.1 * jax.random.normal(ks[0], (planes, in_planes, 3, 3), f32),
        "g1": 1.0 + 0.1 * jax.random.normal(ks[1], (planes,), f32),
        "b1": 0.1 * jax.random.normal(ks[2], (planes,), f32),
        "m1": 0.05 * jax.random.normal(ks[3], (planes,), f32),
        "v1": 1.0 + 0.1 * jax.random.uniform(ks[4], (planes,), f32),
        "w2": 0.1 * jax.random.normal(ks[5], (planes, planes, 3, 3), f32),
        "g2": 1.0 + 0.1 * jax.random.normal(ks[6], (planes,), f32),
        "b2": 0.1 * jax.random.normal(ks[7], (planes,), f32),
        "m2": 0.05 * jax.random.normal(ks[8], (planes,), f32),
        "v2": 1.0 + 0.1 * jax.random.uniform(ks[9], (planes,), f32),
        "wsc": 0.1 * jax.random.normal(ks[10], (planes, in_planes, 1, 1), f32),
        "gsc": jnp.ones((planes,), f32),
        "bsc": jnp.zeros((planes,), f32),
        "msc": jnp.zeros((planes,), f32),
        "vsc": jnp.ones((planes,), f32),
    }


if __name__ == "__main__":
    key = jax.random.PRNGKey(0)
    kx, kp, kx2, kp2 = jax.random.split(key, 4)

    # bf16 MXU operands -> compare against the f32 reference with a loose
    # tolerance (bf16 has ~3 decimal digits of mantissa).
    ATOL = RTOL = 5e-2

    # Config 1: projection shortcut (1x1 conv + BN), is_last=True (preact out)
    N, C_IN, H, W = 2, 4, 16, 16
    PLANES, STRIDE = 8, 2
    x = jax.random.normal(kx, (N, C_IN, H, W), jnp.float32)
    params = _make_params(kp, C_IN, PLANES)

    out, preact = basic_block_forward(x, params, stride=STRIDE, is_last=True)
    out = jax.block_until_ready(out)
    preact = jax.block_until_ready(preact)

    ref_out, ref_pre = _ref_forward(x, params, stride=STRIDE)
    assert out.shape == ref_out.shape == (N, PLANES, H // STRIDE, W // STRIDE)
    assert jnp.allclose(out, ref_out, atol=ATOL, rtol=RTOL)
    assert jnp.allclose(preact, ref_pre, atol=ATOL, rtol=RTOL)

    # Config 2: identity shortcut, is_last=False (single-output fast path)
    C_IN2, PLANES2, STRIDE2 = 8, 8, 1
    x2 = jax.random.normal(kx2, (N, C_IN2, H, W), jnp.float32)
    params2 = _make_params(kp2, C_IN2, PLANES2)

    out2 = basic_block_forward(x2, params2, stride=STRIDE2, is_last=False)
    out2 = jax.block_until_ready(out2)
    ref_out2, _ = _ref_forward(x2, params2, stride=STRIDE2)
    assert out2.shape == ref_out2.shape == (N, PLANES2, H, W)
    assert jnp.allclose(out2, ref_out2, atol=ATOL, rtol=RTOL)

    print("KERNEL_OK")
</pallas_src>

<mosaic_0001>
module attributes {stable_mosaic.version = 11 : i64} {
  func.func @kernel(%arg0: i32, %arg1: i32, %arg2: i32, %arg3: memref<128x128xbf16, #tpu.memory_space<vmem>>, %arg4: memref<128x128xbf16, #tpu.memory_space<vmem>>, %arg5: memref<1x128xf32, #tpu.memory_space<vmem>>, %arg6: memref<128x128xf32, #tpu.memory_space<vmem>>, %arg7: memref<128x128xf32, #tpu.memory_space<vmem>>) attributes {dimension_semantics = [#tpu.dimension_semantics<parallel>, #tpu.dimension_semantics<parallel>, #tpu.dimension_semantics<arbitrary>], iteration_bounds = array<i64: 1, 1, 1>, scalar_prefetch = 0 : i64, scratch_operands = 1 : i64, tpu.core_type = #tpu.core_type<tc>, window_params = [{transform_indices = @transform_0, window_bounds = array<i64: 128, 128>}, {transform_indices = @transform_1, window_bounds = array<i64: 128, 128>}, {transform_indices = @transform_2, window_bounds = array<i64: 1, 128>}, {transform_indices = @transform_3, window_bounds = array<i64: 128, 128>}]} {
    %c0_i32 = arith.constant 0 : i32
    %0 = arith.cmpi eq, %arg2, %c0_i32 : i32
    %1 = arith.extui %0 : i1 to i32
    %c0_i32_0 = arith.constant 0 : i32
    %2 = arith.cmpi ne, %1, %c0_i32_0 : i32
    scf.if %2 {
      %cst_10 = arith.constant 0.000000e+00 : f32
      %12 = vector.broadcast %cst_10 : f32 to vector<128x128xf32>
      %c0_11 = arith.constant 0 : index
      %c0_12 = arith.constant 0 : index
      %13 = vector.load %arg7[%c0_11, %c0_12] : memref<128x128xf32, #tpu.memory_space<vmem>>, vector<128x128xf32>
      tpu.vector_store %arg7[%c0_11, %c0_12], %12 {strides = array<i32>} : memref<128x128xf32, #tpu.memory_space<vmem>>, vector<128x128xf32>,
    } else {
    }
    %c0 = arith.constant 0 : index
    %c0_1 = arith.constant 0 : index
    %3 = vector.load %arg7[%c0, %c0_1] : memref<128x128xf32, #tpu.memory_space<vmem>>, vector<128x128xf32>
    %c0_2 = arith.constant 0 : index
    %c0_3 = arith.constant 0 : index
    %4 = vector.load %arg3[%c0_2, %c0_3] : memref<128x128xbf16, #tpu.memory_space<vmem>>, vector<128x128xbf16>
    %c0_4 = arith.constant 0 : index
    %c0_5 = arith.constant 0 : index
    %5 = vector.load %arg4[%c0_4, %c0_5] : memref<128x128xbf16, #tpu.memory_space<vmem>>, vector<128x128xbf16>
    %cst = arith.constant dense<0.000000e+00> : vector<128x128xf32>
    %6 = tpu.matmul %4, %5, %cst {dimension_numbers = #tpu.dot_dimension_numbers<[1], [0], [0], [1], [0, 0, 1, 1], [], []>} : vector<128x128xbf16>, vector<128x128xbf16>, vector<128x128xf32> -> vector<128x128xf32>
    %7 = arith.addf %3, %6 : vector<128x128xf32>
    %c0_6 = arith.constant 0 : index
    %c0_7 = arith.constant 0 : index
    %8 = vector.load %arg7[%c0_6, %c0_7] : memref<128x128xf32, #tpu.memory_space<vmem>>, vector<128x128xf32>
    tpu.vector_store %arg7[%c0_6, %c0_7], %7 {strides = array<i32>} : memref<128x128xf32, #tpu.memory_space<vmem>>, vector<128x128xf32>,
    %c0_i32_8 = arith.constant 0 : i32
    %9 = arith.cmpi eq, %arg2, %c0_i32_8 : i32
    %10 = arith.extui %9 : i1 to i32
    %c0_i32_9 = arith.constant 0 : i32
    %11 = arith.cmpi ne, %10, %c0_i32_9 : i32
    scf.if %11 {
      %c0_10 = arith.constant 0 : index
      %c0_11 = arith.constant 0 : index
      %12 = vector.load %arg7[%c0_10, %c0_11] : memref<128x128xf32, #tpu.memory_space<vmem>>, vector<128x128xf32>
      %c0_12 = arith.constant 0 : index
      %c0_13 = arith.constant 0 : index
      %13 = vector.load %arg5[%c0_12, %c0_13] : memref<1x128xf32, #tpu.memory_space<vmem>>, vector<1x128xf32>
      %14 = vector.broadcast %13 : vector<1x128xf32> to vector<128x128xf32>
      %15 = arith.addf %12, %14 : vector<128x128xf32>
      %cst_14 = arith.constant 0.000000e+00 : f32
      %16 = vector.broadcast %cst_14 : f32 to vector<128x128xf32>
      %17 = arith.maximumf %15, %16 : vector<128x128xf32>
      %c0_15 = arith.constant 0 : index
      %c0_16 = arith.constant 0 : index
      %18 = vector.load %arg6[%c0_15, %c0_16] : memref<128x128xf32, #tpu.memory_space<vmem>>, vector<128x128xf32>
      tpu.vector_store %arg6[%c0_15, %c0_16], %17 {strides = array<i32>} : memref<128x128xf32, #tpu.memory_space<vmem>>, vector<128x128xf32>,
    } else {
    }
    return
  }
  func.func @transform_0(%arg0: i32, %arg1: i32, %arg2: i32) -> (i32, i32) {
    %c0_i32 = arith.constant 0 : i32
    return %arg0, %arg2 : i32, i32
  }
  func.func @transform_1(%arg0: i32, %arg1: i32, %arg2: i32) -> (i32, i32) {
    %c0_i32 = arith.constant 0 : i32
    return %arg2, %arg1 : i32, i32
  }
  func.func @transform_2(%arg0: i32, %arg1: i32, %arg2: i32) -> (i32, i32) {
    %c0_i32 = arith.constant 0 : i32
    %c0_i32_0 = arith.constant 0 : i32
    return %c0_i32, %arg1 : i32, i32
  }
  func.func @transform_3(%arg0: i32, %arg1: i32, %arg2: i32) -> (i32, i32) {
    %c0_i32 = arith.constant 0 : i32
    return %arg0, %arg1 : i32, i32
  }
}

</mosaic_0001>

<llo_original>
// kernel: tpu_custom_call.1
$region0: #{tpu_custom_call.1}
  #allocation0 [shape = 'u32[]', space=smem, size = 0x4, offset = 0x4, fixed_abs, tag = 'smem constant byte address 0x4 - core index']
  #allocation1 [shape = 'u32[144,128]{1,0:T(1,128)}', space=vmem, size = 0x12000, scoped, tag = 'internal scratch']
  #allocation2 [shape = 'f32[128,128]{1,0:T(8,128)}', space=vmem, size = 0x10000, scoped, tag = 'scratch operand']
  %s0 = inlined_call_operand.hbm [shape: bf16[128,128], index: 0, kind: input, shape index: {}]
  %s1 = inlined_call_operand.hbm [shape: bf16[128,128], index: 1, kind: input, shape index: {}]
  %s2 = inlined_call_operand.vmem [shape: f32[1,128], index: 2, kind: input, shape index: {}]
  %s3 = inlined_call_operand.hbm [shape: f32[128,128], index: 3, kind: output, shape index: {}]
  %s4 = sld [smem:[#allocation0]]
  $region38: #{tpu_custom_call.1} parent=0
    _
  %s6 = ssub.s32 1, %s4
  %s7 = scalar_select 0, %s6, %s4
  $region1: #{tpu_custom_call.1} parent=0
    #allocation3 [shape = 'u8[32768]{0}', space=vmem, size = 0x8000, scoped, tag = 'input window, operand 0, single buffered']
    #allocation4 [shape = 's32[1]{0}', space=sflag, size = 0x4, scoped, tag = 'scoped memory for tpu_custom_call.1']
    #allocation5 [shape = 's32[1]{0}', space=sflag, size = 0x4, scoped, tag = 'scoped memory for tpu_custom_call.1']
    #allocation6 [shape = 'u8[32768]{0}', space=vmem, size = 0x8000, scoped, tag = 'input window, operand 1, single buffered']
    #allocation7 [shape = 's32[1]{0}', space=sflag, size = 0x4, scoped, tag = 'scoped memory for tpu_custom_call.1']
    #allocation8 [shape = 'u8[65536]{0}', space=vmem, size = 0x10000, scoped, tag = 'output window, operand 0, single buffered']
    %8 = vsyncpa [#allocation4], 0
    %9 = vsyncpa [#allocation7], 0
    %10 = vsyncpa [#allocation5], 0
    // Predicated region
    $region2: #{tpu_custom_call.1} parent=1 // pred_check
      _
    $region3: #{tpu_custom_call.1} parent=1 // pred_check_branch
      %12 = sbr.rel (0) target = $region5
    $region4: #{tpu_custom_call.1} parent=1 // pred_region
      %s14 = ssub.s32 1024, 1024
      %15 = vsyncadd [#allocation4], %s14
      %s16 = sshll.u32 [#allocation3], 4
      %s17 = int_to_ptr.vmem [resolvable:$true] %s16
      %22 = dma.hbm_to_vmem [thread:$0]  %s0, 1024, %s17, [#allocation4], 64, 64, 4
    $region5: #{tpu_custom_call.1} parent=1 // pred_fallthru
      _
    // Predicated region
    $region6: #{tpu_custom_call.1} parent=1 // pred_check
      _
    $region7: #{tpu_custom_call.1} parent=1 // pred_check_branch
      %24 = sbr.rel (0) target = $region9
    $region8: #{tpu_custom_call.1} parent=1 // pred_region
      %s26 = ssub.s32 1024, 1024
      %27 = vsyncadd [#allocation7], %s26
      %s28 = sshll.u32 [#allocation6], 4
      %s29 = int_to_ptr.vmem [resolvable:$true] %s28
      %34 = dma.hbm_to_vmem [thread:$0]  %s1, 1024, %s29, [#allocation7], 64, 64, 4
    $region9: #{tpu_custom_call.1} parent=1 // pred_fallthru
      _
    // Predicated region
    $region10: #{tpu_custom_call.1} parent=1 // pred_check
      _
    $region11: #{tpu_custom_call.1} parent=1 // pred_check_branch
      %36 = sbr.rel (0) target = $region13
    $region12: #{tpu_custom_call.1} parent=1 // pred_region
      _
    $region13: #{tpu_custom_call.1} parent=1 // pred_fallthru
      _
    // Predicated region
    $region14: #{tpu_custom_call.1} parent=1 // pred_check
      _
    $region15: #{tpu_custom_call.1} parent=1 // pred_check_branch
      %38 = sbr.rel (0) target = $region17
    $region16: #{tpu_custom_call.1} parent=1 // pred_region
      %39 = dma.done [#allocation4], 1024
    $region17: #{tpu_custom_call.1} parent=1 // pred_fallthru
      _
    // Predicated region
    $region18: #{tpu_custom_call.1} parent=1 // pred_check
      _
    $region19: #{tpu_custom_call.1} parent=1 // pred_check_branch
      %41 = sbr.rel (0) target = $region21
    $region20: #{tpu_custom_call.1} parent=1 // pred_region
      %42 = dma.done [#allocation7], 1024
    $region21: #{tpu_custom_call.1} parent=1 // pred_fallthru
      _
    %p44 = scmp.eq.s32.totalorder 0, 0
    // Predicated region
    $region22: #{tpu_custom_call.1} parent=1 // pred_check
      %p45 = pneg %p44
    $region23: #{tpu_custom_call.1} parent=1 // pred_check_branch
      %47 = sbr.rel (%p45) target = $region25
    $region24: #{tpu_custom_call.1} parent=1 // pred_region
      %48 = vst [vmem:[#allocation2] sm:$0xff] 0.0
      %49 = vst [vmem:[#allocation2 + $0x8] sm:$0xff] 0.0
      %50 = vst [vmem:[#allocation2 + $0x10] sm:$0xff] 0.0
      %51 = vst [vmem:[#allocation2 + $0x18] sm:$0xff] 0.0
      %52 = vst [vmem:[#allocation2 + $0x20] sm:$0xff] 0.0
      %53 = vst [vmem:[#allocation2 + $0x28] sm:$0xff] 0.0
      %54 = vst [vmem:[#allocation2 + $0x30] sm:$0xff] 0.0
      %55 = vst [vmem:[#allocation2 + $0x38] sm:$0xff] 0.0
      %56 = vst [vmem:[#allocation2 + $0x40] sm:$0xff] 0.0
      %57 = vst [vmem:[#allocation2 + $0x48] sm:$0xff] 0.0
      %58 = vst [vmem:[#allocation2 + $0x50] sm:$0xff] 0.0
      %59 = vst [vmem:[#allocation2 + $0x58] sm:$0xff] 0.0
      %60 = vst [vmem:[#allocation2 + $0x60] sm:$0xff] 0.0
      %61 = vst [vmem:[#allocation2 + $0x68] sm:$0xff] 0.0
      %62 = vst [vmem:[#allocation2 + $0x70] sm:$0xff] 0.0
      %63 = vst [vmem:[#allocation2 + $0x78] sm:$0xff] 0.0
    $region25: #{tpu_custom_call.1} parent=1 // pred_fallthru
      _
    %v64 = vld [vmem:[#allocation2] sm:$0xff]
    %v65 = vld [vmem:[#allocation2 + $0x8] sm:$0xff]
    %v66 = vld [vmem:[#allocation2 + $0x10] sm:$0xff]
    %v67 = vld [vmem:[#allocation2 + $0x18] sm:$0xff]
    %v68 = vld [vmem:[#allocation2 + $0x20] sm:$0xff]
    %v69 = vld [vmem:[#allocation2 + $0x28] sm:$0xff]
    %v70 = vld [vmem:[#allocation2 + $0x30] sm:$0xff]
    %v71 = vld [vmem:[#allocation2 + $0x38] sm:$0xff]
    %v72 = vld [vmem:[#allocation2 + $0x40] sm:$0xff]
    %v73 = vld [vmem:[#allocation2 + $0x48] sm:$0xff]
    %v74 = vld [vmem:[#allocation2 + $0x50] sm:$0xff]
    %v75 = vld [vmem:[#allocation2 + $0x58] sm:$0xff]
    %v76 = vld [vmem:[#allocation2 + $0x60] sm:$0xff]
    %v77 = vld [vmem:[#allocation2 + $0x68] sm:$0xff]
    %v78 = vld [vmem:[#allocation2 + $0x70] sm:$0xff]
    %v79 = vld [vmem:[#allocation2 + $0x78] sm:$0xff]
    %v80 = vld [vmem:[#allocation3] sm:$0xf]
    %v81 = vld [vmem:[#allocation3 + $0x4] sm:$0xf]
    %v82 = vld [vmem:[#allocation3 + $0x8] sm:$0xf]
    %v83 = vld [vmem:[#allocation3 + $0xc] sm:$0xf]
    %v84 = vld [vmem:[#allocation3 + $0x10] sm:$0xf]
    %v85 = vld [vmem:[#allocation3 + $0x14] sm:$0xf]
    %v86 = vld [vmem:[#allocation3 + $0x18] sm:$0xf]
    %v87 = vld [vmem:[#allocation3 + $0x1c] sm:$0xf]
    %v88 = vld [vmem:[#allocation3 + $0x20] sm:$0xf]
    %v89 = vld [vmem:[#allocation3 + $0x24] sm:$0xf]
    %v90 = vld [vmem:[#allocation3 + $0x28] sm:$0xf]
    %v91 = vld [vmem:[#allocation3 + $0x2c] sm:$0xf]
    %v92 = vld [vmem:[#allocation3 + $0x30] sm:$0xf]
    %v93 = vld [vmem:[#allocation3 + $0x34] sm:$0xf]
    %v94 = vld [vmem:[#allocation3 + $0x38] sm:$0xf]
    %v95 = vld [vmem:[#allocation3 + $0x3c] sm:$0xf]
    %v96 = vld [vmem:[#allocation6] sm:$0xf]
    %v97 = vld [vmem:[#allocation6 + $0x4] sm:$0xf]
    %v98 = vld [vmem:[#allocation6 + $0x8] sm:$0xf]
    %v99 = vld [vmem:[#allocation6 + $0xc] sm:$0xf]
    %v100 = vld [vmem:[#allocation6 + $0x10] sm:$0xf]
    %v101 = vld [vmem:[#allocation6 + $0x14] sm:$0xf]
    %v102 = vld [vmem:[#allocation6 + $0x18] sm:$0xf]
    %v103 = vld [vmem:[#allocation6 + $0x1c] sm:$0xf]
    %v104 = vld [vmem:[#allocation6 + $0x20] sm:$0xf]
    %v105 = vld [vmem:[#allocation6 + $0x24] sm:$0xf]
    %v106 = vld [vmem:[#allocation6 + $0x28] sm:$0xf]
    %v107 = vld [vmem:[#allocation6 + $0x2c] sm:$0xf]
    %v108 = vld [vmem:[#allocation6 + $0x30] sm:$0xf]
    %v109 = vld [vmem:[#allocation6 + $0x34] sm:$0xf]
    %v110 = vld [vmem:[#allocation6 + $0x38] sm:$0xf]
    %v111 = vld [vmem:[#allocation6 + $0x3c] sm:$0xf]
    %v128 = vunpack.c.l.b16 %v80
    %v129 = vunpack.c.l.b16 %v81
    %v130 = vunpack.c.l.b16 %v82
    %v131 = vunpack.c.l.b16 %v83
    %v132 = vunpack.c.l.b16 %v84
    %v133 = vunpack.c.l.b16 %v85
    %v134 = vunpack.c.l.b16 %v86
    %v135 = vunpack.c.l.b16 %v87
    %v136 = vunpack.c.l.b16 %v88
    %v137 = vunpack.c.l.b16 %v89
    %v138 = vunpack.c.l.b16 %v90
    %v139 = vunpack.c.l.b16 %v91
    %v140 = vunpack.c.l.b16 %v92
    %v141 = vunpack.c.l.b16 %v93
    %v142 = vunpack.c.l.b16 %v94
    %v143 = vunpack.c.l.b16 %v95
    %v144 = vpack.c.b16 %v129, %v128
    %v145 = vpack.c.b16 %v131, %v130
    %v146 = vpack.c.b16 %v133, %v132
    %v147 = vpack.c.b16 %v135, %v134
    %v148 = vpack.c.b16 %v137, %v136
    %v149 = vpack.c.b16 %v139, %v138
    %v150 = vpack.c.b16 %v141, %v140
    %v151 = vpack.c.b16 %v143, %v142
    %v176 = vunpack.c.l.b16 %v96
    %v177 = vunpack.c.l.b16 %v97
    %v178 = vunpack.c.l.b16 %v98
    %v179 = vunpack.c.l.b16 %v99
    %v180 = vunpack.c.l.b16 %v100
    %v181 = vunpack.c.l.b16 %v101
    %v182 = vunpack.c.l.b16 %v102
    %v183 = vunpack.c.l.b16 %v103
    %v184 = vunpack.c.l.b16 %v104
    %v185 = vunpack.c.l.b16 %v105
    %v186 = vunpack.c.l.b16 %v106
    %v187 = vunpack.c.l.b16 %v107
    %v188 = vunpack.c.l.b16 %v108
    %v189 = vunpack.c.l.b16 %v109
    %v190 = vunpack.c.l.b16 %v110
    %v191 = vunpack.c.l.b16 %v111
    %v192 = vpack.c.b16 %v177, %v176
    %v193 = vpack.c.b16 %v179, %v178
    %v194 = vpack.c.b16 %v181, %v180
    %v195 = vpack.c.b16 %v183, %v182
    %v196 = vpack.c.b16 %v185, %v184
    %v197 = vpack.c.b16 %v187, %v186
    %v198 = vpack.c.b16 %v189, %v188
    %v199 = vpack.c.b16 %v191, %v190
    %208 = vmatprep.subr.bf16.mxu0 0
    %209 = vmatpush1.bf16.msra.mxu0 %v192
    %210 = vmatprep.subr.bf16.mxu0 0
    %211 = vmatpush1.bf16.msra.mxu0 %v193
    %212 = vmatprep.subr.bf16.mxu0 0
    %213 = vmatpush1.bf16.msra.mxu0 %v194
    %214 = vmatprep.subr.bf16.mxu0 0
    %215 = vmatpush1.bf16.msra.mxu0 %v195
    %216 = vmatprep.subr.bf16.mxu0 0
    %217 = vmatpush1.bf16.msra.mxu0 %v196
    %218 = vmatprep.subr.bf16.mxu0 0
    %219 = vmatpush1.bf16.msra.mxu0 %v197
    %220 = vmatprep.subr.bf16.mxu0 0
    %221 = vmatpush1.bf16.msra.mxu0 %v198
    %222 = vmatprep.subr.bf16.mxu0 0
    %223 = vmatpush1.bf16.msra.mxu0 %v199
    %224 = vmatprep.subr.bf16.mxu0 0
    %225 = vmatpush1.bf16.msra.mxu0 0
    %226 = vmatprep.subr.bf16.mxu0 0
    %227 = vmatpush1.bf16.msra.mxu0 0
    %228 = vmatprep.subr.bf16.mxu0 0
    %229 = vmatpush1.bf16.msra.mxu0 0
    %230 = vmatprep.subr.bf16.mxu0 0
    %231 = vmatpush1.bf16.msra.mxu0 0
    %232 = vmatprep.subr.bf16.mxu0 0
    %233 = vmatpush1.bf16.msra.mxu0 0
    %234 = vmatprep.subr.bf16.mxu0 0
    %235 = vmatpush1.bf16.msra.mxu0 0
    %236 = vmatprep.subr.bf16.mxu0 0
    %237 = vmatpush1.bf16.msra.mxu0 0
    %238 = vmatprep.subr.bf16.mxu0 0
    %239 = vmatpush1.bf16.msra.mxu0 0
    %240 = vmatprep.mubr.bf16.mxu0 0
    %241 = vmatmul.mubr.bf16.gmra.mrb[0].mxu0 %v144
    %v242 = vpop.f32.mrb[0].mxu0
    %v243 = vadd.f32 0.0, %v242
    %v244 = vpop.f32.mrb[0].mxu0
    %v245 = vpop.f32.mrb[0].mxu0
    %v246 = vadd.f32 0.0, %v245
    %v247 = vpop.f32.mrb[0].mxu0
    %248 = vmatprep.mubr.bf16.mxu0 0
    %249 = vmatmul.mubr.bf16.gmra.mrb[0].mxu0 %v145
    %v250 = vpop.f32.mrb[0].mxu0
    %v251 = vadd.f32 0.0, %v250
    %v252 = vpop.f32.mrb[0].mxu0
    %v253 = vpop.f32.mrb[0].mxu0
    %v254 = vadd.f32 0.0, %v253
    %v255 = vpop.f32.mrb[0].mxu0
    %256 = vmatprep.mubr.bf16.mxu0 0
    %257 = vmatmul.mubr.bf16.gmra.mrb[0].mxu0 %v146
    %v258 = vpop.f32.mrb[0].mxu0
    %v259 = vadd.f32 0.0, %v258
    %v260 = vpop.f32.mrb[0].mxu0
    %v261 = vpop.f32.mrb[0].mxu0
    %v262 = vadd.f32 0.0, %v261
    %v263 = vpop.f32.mrb[0].mxu0
    %264 = vmatprep.mubr.bf16.mxu0 0
    %265 = vmatmul.mubr.bf16.gmra.mrb[0].mxu0 %v147
    %v266 = vpop.f32.mrb[0].mxu0
    %v267 = vadd.f32 0.0, %v266
    %v268 = vpop.f32.mrb[0].mxu0
    %v269 = vpop.f32.mrb[0].mxu0
    %v270 = vadd.f32 0.0, %v269
    %v271 = vpop.f32.mrb[0].mxu0
    %272 = vmatprep.mubr.bf16.mxu0 0
    %273 = vmatmul.mubr.bf16.gmra.mrb[0].mxu0 %v148
    %v274 = vpop.f32.mrb[0].mxu0
    %v275 = vadd.f32 0.0, %v274
    %v276 = vpop.f32.mrb[0].mxu0
    %v277 = vpop.f32.mrb[0].mxu0
    %v278 = vadd.f32 0.0, %v277
    %v279 = vpop.f32.mrb[0].mxu0
    %280 = vmatprep.mubr.bf16.mxu0 0
    %281 = vmatmul.mubr.bf16.gmra.mrb[0].mxu0 %v149
    %v282 = vpop.f32.mrb[0].mxu0
    %v283 = vadd.f32 0.0, %v282
    %v284 = vpop.f32.mrb[0].mxu0
    %v285 = vpop.f32.mrb[0].mxu0
    %v286 = vadd.f32 0.0, %v285
    %v287 = vpop.f32.mrb[0].mxu0
    %288 = vmatprep.mubr.bf16.mxu0 0
    %289 = vmatmul.mubr.bf16.gmra.mrb[0].mxu0 %v150
    %v290 = vpop.f32.mrb[0].mxu0
    %v291 = vadd.f32 0.0, %v290
    %v292 = vpop.f32.mrb[0].mxu0
    %v293 = vpop.f32.mrb[0].mxu0
    %v294 = vadd.f32 0.0, %v293
    %v295 = vpop.f32.mrb[0].mxu0
    %296 = vmatprep.mubr.bf16.mxu0 0
    %297 = vmatmul.mubr.bf16.gmra.mrb[0].mxu0 %v151
    %v298 = vpop.f32.mrb[0].mxu0
    %v299 = vadd.f32 0.0, %v298
    %v300 = vpop.f32.mrb[0].mxu0
    %v301 = vpop.f32.mrb[0].mxu0
    %v302 = vadd.f32 0.0, %v301
    %v303 = vpop.f32.mrb[0].mxu0
    %304 = vdwg.mxu0
    %v305 = vadd.f32 %v64, %v243
    %v306 = vadd.f32 %v65, %v246
    %v307 = vadd.f32 %v66, %v251
    %v308 = vadd.f32 %v67, %v254
    %v309 = vadd.f32 %v68, %v259
    %v310 = vadd.f32 %v69, %v262
    %v311 = vadd.f32 %v70, %v267
    %v312 = vadd.f32 %v71, %v270
    %v313 = vadd.f32 %v72, %v275
    %v314 = vadd.f32 %v73, %v278
    %v315 = vadd.f32 %v74, %v283
    %v316 = vadd.f32 %v75, %v286
    %v317 = vadd.f32 %v76, %v291
    %v318 = vadd.f32 %v77, %v294
    %v319 = vadd.f32 %v78, %v299
    %v320 = vadd.f32 %v79, %v302
    %321 = vst [vmem:[#allocation2] sm:$0xff] %v305
    %322 = vst [vmem:[#allocation2 + $0x8] sm:$0xff] %v306
    %323 = vst [vmem:[#allocation2 + $0x10] sm:$0xff] %v307
    %324 = vst [vmem:[#allocation2 + $0x18] sm:$0xff] %v308
    %325 = vst [vmem:[#allocation2 + $0x20] sm:$0xff] %v309
    %326 = vst [vmem:[#allocation2 + $0x28] sm:$0xff] %v310
    %327 = vst [vmem:[#allocation2 + $0x30] sm:$0xff] %v311
    %328 = vst [vmem:[#allocation2 + $0x38] sm:$0xff] %v312
    %329 = vst [vmem:[#allocation2 + $0x40] sm:$0xff] %v313
    %330 = vst [vmem:[#allocation2 + $0x48] sm:$0xff] %v314
    %331 = vst [vmem:[#allocation2 + $0x50] sm:$0xff] %v315
    %332 = vst [vmem:[#allocation2 + $0x58] sm:$0xff] %v316
    %333 = vst [vmem:[#allocation2 + $0x60] sm:$0xff] %v317
    %334 = vst [vmem:[#allocation2 + $0x68] sm:$0xff] %v318
    %335 = vst [vmem:[#allocation2 + $0x70] sm:$0xff] %v319
    %336 = vst [vmem:[#allocation2 + $0x78] sm:$0xff] %v320
    // Predicated region
    $region26: #{tpu_custom_call.1} parent=1 // pred_check
      %p337 = pneg %p44
    $region27: #{tpu_custom_call.1} parent=1 // pred_check_branch
      %339 = sbr.rel (%p337) target = $region29
    $region28: #{tpu_custom_call.1} parent=1 // pred_region
      %v340 = vld [vmem:[#allocation2] sm:$0xff]
      %v341 = vld [vmem:[#allocation2 + $0x8] sm:$0xff]
      %v342 = vld [vmem:[#allocation2 + $0x10] sm:$0xff]
      %v343 = vld [vmem:[#allocation2 + $0x18] sm:$0xff]
      %v344 = vld [vmem:[#allocation2 + $0x20] sm:$0xff]
      %v345 = vld [vmem:[#allocation2 + $0x28] sm:$0xff]
      %v346 = vld [vmem:[#allocation2 + $0x30] sm:$0xff]
      %v347 = vld [vmem:[#allocation2 + $0x38] sm:$0xff]
      %v348 = vld [vmem:[#allocation2 + $0x40] sm:$0xff]
      %v349 = vld [vmem:[#allocation2 + $0x48] sm:$0xff]
      %v350 = vld [vmem:[#allocation2 + $0x50] sm:$0xff]
      %v351 = vld [vmem:[#allocation2 + $0x58] sm:$0xff]
      %v352 = vld [vmem:[#allocation2 + $0x60] sm:$0xff]
      %v353 = vld [vmem:[#allocation2 + $0x68] sm:$0xff]
      %v354 = vld [vmem:[#allocation2 + $0x70] sm:$0xff]
      %v355 = vld [vmem:[#allocation2 + $0x78] sm:$0xff]
      %v356 = vld [vmem:[%s2] sm:$0x1]
      %v358 = vlaneseq
      %v359 = vshrl.u32 %v358, 7
      %v360 = vsub.s32 0, %v359
      %v361 = vrot.slane %v356, %v360
      %v363 = vadd.f32 %v340, %v361
      %v364 = vadd.f32 %v341, %v361
      %v365 = vadd.f32 %v342, %v361
      %v366 = vadd.f32 %v343, %v361
      %v367 = vadd.f32 %v344, %v361
      %v368 = vadd.f32 %v345, %v361
      %v369 = vadd.f32 %v346, %v361
      %v370 = vadd.f32 %v347, %v361
      %v371 = vadd.f32 %v348, %v361
      %v372 = vadd.f32 %v349, %v361
      %v373 = vadd.f32 %v350, %v361
      %v374 = vadd.f32 %v351, %v361
      %v375 = vadd.f32 %v352, %v361
      %v376 = vadd.f32 %v353, %v361
      %v377 = vadd.f32 %v354, %v361
      %v378 = vadd.f32 %v355, %v361
      %v379 = vmax.f32 %v363, 0.0
      %v380 = vmax.f32 %v364, 0.0
      %v381 = vmax.f32 %v365, 0.0
      %v382 = vmax.f32 %v366, 0.0
      %v383 = vmax.f32 %v367, 0.0
      %v384 = vmax.f32 %v368, 0.0
      %v385 = vmax.f32 %v369, 0.0
      %v386 = vmax.f32 %v370, 0.0
      %v387 = vmax.f32 %v371, 0.0
      %v388 = vmax.f32 %v372, 0.0
      %v389 = vmax.f32 %v373, 0.0
      %v390 = vmax.f32 %v374, 0.0
      %v391 = vmax.f32 %v375, 0.0
      %v392 = vmax.f32 %v376, 0.0
      %v393 = vmax.f32 %v377, 0.0
      %v394 = vmax.f32 %v378, 0.0
      %395 = vst [vmem:[#allocation8] sm:$0xff] %v379
      %396 = vst [vmem:[#allocation8 + $0x8] sm:$0xff] %v380
      %397 = vst [vmem:[#allocation8 + $0x10] sm:$0xff] %v381
      %398 = vst [vmem:[#allocation8 + $0x18] sm:$0xff] %v382
      %399 = vst [vmem:[#allocation8 + $0x20] sm:$0xff] %v383
      %400 = vst [vmem:[#allocation8 + $0x28] sm:$0xff] %v384
      %401 = vst [vmem:[#allocation8 + $0x30] sm:$0xff] %v385
      %402 = vst [vmem:[#allocation8 + $0x38] sm:$0xff] %v386
      %403 = vst [vmem:[#allocation8 + $0x40] sm:$0xff] %v387
      %404 = vst [vmem:[#allocation8 + $0x48] sm:$0xff] %v388
      %405 = vst [vmem:[#allocation8 + $0x50] sm:$0xff] %v389
      %406 = vst [vmem:[#allocation8 + $0x58] sm:$0xff] %v390
      %407 = vst [vmem:[#allocation8 + $0x60] sm:$0xff] %v391
      %408 = vst [vmem:[#allocation8 + $0x68] sm:$0xff] %v392
      %409 = vst [vmem:[#allocation8 + $0x70] sm:$0xff] %v393
      %410 = vst [vmem:[#allocation8 + $0x78] sm:$0xff] %v394
    $region29: #{tpu_custom_call.1} parent=1 // pred_fallthru
      _
    // Predicated region
    $region30: #{tpu_custom_call.1} parent=1 // pred_check
      _
    $region31: #{tpu_custom_call.1} parent=1 // pred_check_branch
      %412 = sbr.rel (0) target = $region33
    $region32: #{tpu_custom_call.1} parent=1 // pred_region
      %s414 = ssub.s32 2048, 2048
      %415 = vsyncadd [#allocation5], %s414
      %s416 = sshll.u32 [#allocation8], 4
      %s417 = int_to_ptr.vmem [resolvable:$true] %s416
      %422 = dma.vmem_to_hbm [thread:$0]  %s417, 2048, %s3, [#allocation5], 128, 128, 8
    $region33: #{tpu_custom_call.1} parent=1 // pred_fallthru
      _
    // Predicated region
    $region34: #{tpu_custom_call.1} parent=1 // pred_check
      _
    $region35: #{tpu_custom_call.1} parent=1 // pred_check_branch
      %424 = sbr.rel (0) target = $region37
    $region36: #{tpu_custom_call.1} parent=1 // pred_region
      %425 = dma.done [#allocation5], 2048
    $region37: #{tpu_custom_call.1} parent=1 // pred_fallthru
      _
    %426 = vsyncpa [#allocation4], 1
    %427 = vsyncpa [#allocation7], 1
    %428 = vsyncpa [#allocation5], 1

</llo_original>
